<compile_context>
chip_gen: v7x
topology: tpu7x:2x2x1
jax: 0.10.0
libtpu: 0.0.40
codegen_flags: <defaults>
</compile_context>

<pallas_src>
import functools

import jax
import jax.numpy as jnp
from jax.experimental import pallas as pl
from jax.experimental.pallas import tpu as pltpu


# ----------------------------- Pallas kernel ------------------------------ #

def _band_matrix(n):
    """(n, n) banded matrix for the separable Gaussian taps [1/4, 1/2, 1/4]."""
    ii = jax.lax.broadcasted_iota(jnp.int32, (n, n), 0)
    jj = jax.lax.broadcasted_iota(jnp.int32, (n, n), 1)
    d = jnp.abs(ii - jj)
    return jnp.where(d == 0, 0.5,
                     jnp.where(d == 1, 0.25, 0.0)).astype(jnp.float32)


def _hsv_hotmap_kernel(x_ref, o_ref, *, eps, lower_red, upper_red):
    x = x_ref[...]                       # (1, 3, H, W) block for one image
    r = x[0, 0].astype(jnp.float32)      # (H, W)
    g = x[0, 1].astype(jnp.float32)
    b = x[0, 2].astype(jnp.float32)
    H, W = r.shape

    # ---- rgb_to_hsv (matches the torch in-place assignment order) ----
    maxc = jnp.maximum(jnp.maximum(r, g), b)
    minc = jnp.minimum(jnp.minimum(r, g), b)
    denom = maxc - minc + eps

    hue = jnp.zeros_like(r)
    hue = jnp.where(b == maxc, 4.0 + (r - g) / denom, hue)   # blue is max
    hue = jnp.where(g == maxc, 2.0 + (b - r) / denom, hue)   # green is max
    q = (g - b) / denom                                      # red is max: (q % 6)
    hue = jnp.where(r == maxc, q - 6.0 * jnp.floor(q * (1.0 / 6.0)), hue)
    hue = jnp.where(minc == maxc, 0.0, hue)                  # grayscale
    hue = hue * (1.0 / 6.0)

    sat = (maxc - minc) / (maxc + eps)
    sat = jnp.where(maxc == 0.0, 0.0, sat)
    val = maxc

    # ---- filter_out_red (thresholds are on hsv * 255) ----
    h255 = hue * 255.0
    s255 = sat * 255.0
    v255 = val * 255.0
    mask = ((h255 >= lower_red[0]) & (s255 >= lower_red[1]) & (v255 >= lower_red[2])
            & (h255 < upper_red[0]) & (s255 <= upper_red[1]) & (v255 <= upper_red[2]))
    mask_f = mask.astype(jnp.float32)

    # ---- 3x3 Gaussian blur (separable) as two banded matmuls on the MXU ----
    a_h = _band_matrix(H)                # (H, H)
    a_w = _band_matrix(W)                # (W, W)
    tmp = jnp.dot(a_h, mask_f, preferred_element_type=jnp.float32)   # rows
    hot = jnp.dot(tmp, a_w, preferred_element_type=jnp.float32)      # cols

    o_ref[...] = hot[None, None].astype(o_ref.dtype)


# ------------------------------ host wrapper ------------------------------ #

def hsv_hotmap_forward(x_nchw, *, eps=1e-8,
                       lower_red=(0.0, 110.0, 110.0),
                       upper_red=(14.0, 255.0, 255.0)):
    """Fused HSVHotMap.forward (method 'hot') via a single Pallas kernel."""
    x = x_nchw.astype(jnp.float32)
    N, C, H, W = x.shape
    assert C == 3, "HSVHotMap expects RGB input (3 channels)"

    kernel = functools.partial(
        _hsv_hotmap_kernel,
        eps=float(eps),
        lower_red=tuple(float(v) for v in lower_red),
        upper_red=tuple(float(v) for v in upper_red))

    out = pl.pallas_call(
        kernel,
        out_shape=jax.ShapeDtypeStruct((N, 1, H, W), jnp.float32),
        grid=(N,),
        in_specs=[pl.BlockSpec((1, C, H, W), lambda n: (n, 0, 0, 0))],
        out_specs=pl.BlockSpec((1, 1, H, W), lambda n: (n, 0, 0, 0)),
        compiler_params=pltpu.CompilerParams(
            dimension_semantics=("parallel",)),
    )(x)
    return out.astype(x_nchw.dtype)


# ------------------------ pure-JAX reference check ------------------------ #

def _ref_forward(x, eps=1e-8, lower_red=(0.0, 110.0, 110.0),
                 upper_red=(14.0, 255.0, 255.0)):
    x = x.astype(jnp.float32)
    r, g, b = x[:, 0], x[:, 1], x[:, 2]
    maxc = jnp.max(x, axis=1)
    minc = jnp.min(x, axis=1)
    denom = maxc - minc + eps

    hue = jnp.zeros_like(maxc)
    hue = jnp.where(b == maxc, 4.0 + (r - g) / denom, hue)
    hue = jnp.where(g == maxc, 2.0 + (b - r) / denom, hue)
    hue = jnp.where(r == maxc, jnp.mod((g - b) / denom, 6.0), hue)
    hue = jnp.where(minc == maxc, 0.0, hue)
    hue = hue / 6.0
    sat = (maxc - minc) / (maxc + eps)
    sat = jnp.where(maxc == 0.0, 0.0, sat)
    val = maxc

    h255, s255, v255 = hue * 255.0, sat * 255.0, val * 255.0
    mask = ((h255 >= lower_red[0]) & (s255 >= lower_red[1]) & (v255 >= lower_red[2])
            & (h255 < upper_red[0]) & (s255 <= upper_red[1]) & (v255 <= upper_red[2]))
    mask = mask.astype(jnp.float32)[:, None]               # (N, 1, H, W)

    w = jnp.array([[1 / 16, 1 / 8, 1 / 16],
                   [1 / 8, 1 / 4, 1 / 8],
                   [1 / 16, 1 / 8, 1 / 16]], jnp.float32).reshape(1, 1, 3, 3)
    return jax.lax.conv_general_dilated(
        mask, w, window_strides=(1, 1), padding=[(1, 1), (1, 1)],
        dimension_numbers=("NCHW", "OIHW", "NCHW"))


# ---------------------------------- main ----------------------------------- #

if __name__ == "__main__":
    N, C, H, W = 2, 3, 16, 16

    key = jax.random.PRNGKey(0)
    kr, kg, kb = jax.random.split(key, 3)
    # Bias the image toward reddish pixels so the thresholded mask is non-trivial.
    r = 0.5 + 0.5 * jax.random.uniform(kr, (N, 1, H, W), jnp.float32)
    g = 0.7 * jax.random.uniform(kg, (N, 1, H, W), jnp.float32)
    b = 0.7 * jax.random.uniform(kb, (N, 1, H, W), jnp.float32)
    x = jnp.concatenate([r, g, b], axis=1)
    # Guarantee at least one strongly-red pixel per image.
    x = x.at[:, :, 0, 0].set(jnp.array([1.0, 0.1, 0.1], jnp.float32))

    out = jax.block_until_ready(hsv_hotmap_forward(x))
    ref = jax.block_until_ready(_ref_forward(x))

    assert out.shape == ref.shape == (N, 1, H, W), (out.shape, ref.shape)
    assert bool(jnp.any(ref > 0)), "red mask unexpectedly empty"
    assert jnp.allclose(out, ref, rtol=1e-5, atol=1e-5), float(
        jnp.max(jnp.abs(out - ref)))

    print("KERNEL_OK")
</pallas_src>

<mosaic_0001>
module attributes {stable_mosaic.version = 11 : i64} {
  func.func @_hsv_hotmap_kernel(%arg0: i32, %arg1: memref<1x3x16x16xf32, #tpu.memory_space<vmem>>, %arg2: memref<1x1x16x16xf32, #tpu.memory_space<vmem>>) attributes {dimension_semantics = [#tpu.dimension_semantics<parallel>], iteration_bounds = array<i64: 2>, scalar_prefetch = 0 : i64, scratch_operands = 0 : i64, tpu.core_type = #tpu.core_type<tc>, window_params = [{transform_indices = @transform_0, window_bounds = array<i64: 1, 3, 16, 16>}, {transform_indices = @transform_1, window_bounds = array<i64: 1, 1, 16, 16>}]} {
    %c0 = arith.constant 0 : index
    %c0_0 = arith.constant 0 : index
    %c0_1 = arith.constant 0 : index
    %c0_2 = arith.constant 0 : index
    %0 = vector.load %arg1[%c0, %c0_0, %c0_1, %c0_2] : memref<1x3x16x16xf32, #tpu.memory_space<vmem>>, vector<1x3x16x16xf32>
    %1 = vector.extract_strided_slice %0 {offsets = [0, 0, 0, 0], sizes = [1, 1, 16, 16], strides = [1, 1, 1, 1]} : vector<1x3x16x16xf32> to vector<1x1x16x16xf32>
    %2 = vector.shape_cast %1 : vector<1x1x16x16xf32> to vector<16x16xf32>
    %3 = vector.extract_strided_slice %0 {offsets = [0, 1, 0, 0], sizes = [1, 1, 16, 16], strides = [1, 1, 1, 1]} : vector<1x3x16x16xf32> to vector<1x1x16x16xf32>
    %4 = vector.shape_cast %3 : vector<1x1x16x16xf32> to vector<16x16xf32>
    %5 = vector.extract_strided_slice %0 {offsets = [0, 2, 0, 0], sizes = [1, 1, 16, 16], strides = [1, 1, 1, 1]} : vector<1x3x16x16xf32> to vector<1x1x16x16xf32>
    %6 = vector.shape_cast %5 : vector<1x1x16x16xf32> to vector<16x16xf32>
    %7 = arith.maximumf %2, %4 : vector<16x16xf32>
    %8 = arith.maximumf %7, %6 : vector<16x16xf32>
    %9 = arith.minimumf %2, %4 : vector<16x16xf32>
    %10 = arith.minimumf %9, %6 : vector<16x16xf32>
    %11 = arith.subf %8, %10 : vector<16x16xf32>
    %cst = arith.constant 9.99999993E-9 : f32
    %12 = vector.broadcast %cst : f32 to vector<16x16xf32>
    %13 = arith.addf %11, %12 : vector<16x16xf32>
    %cst_3 = arith.constant 0.000000e+00 : f32
    %14 = vector.broadcast %cst_3 : f32 to vector<16x16xf32>
    %15 = arith.cmpf oeq, %6, %8 : vector<16x16xf32>
    %16 = arith.subf %2, %4 : vector<16x16xf32>
    %17 = arith.divf %16, %13 : vector<16x16xf32>
    %cst_4 = arith.constant 4.000000e+00 : f32
    %18 = vector.broadcast %cst_4 : f32 to vector<16x16xf32>
    %19 = arith.addf %18, %17 : vector<16x16xf32>
    %20 = arith.select %15, %19, %14 : vector<16x16xi1>, vector<16x16xf32>
    %21 = arith.cmpf oeq, %4, %8 : vector<16x16xf32>
    %22 = arith.subf %6, %2 : vector<16x16xf32>
    %23 = arith.divf %22, %13 : vector<16x16xf32>
    %cst_5 = arith.constant 2.000000e+00 : f32
    %24 = vector.broadcast %cst_5 : f32 to vector<16x16xf32>
    %25 = arith.addf %24, %23 : vector<16x16xf32>
    %26 = arith.select %21, %25, %20 : vector<16x16xi1>, vector<16x16xf32>
    %27 = arith.subf %4, %6 : vector<16x16xf32>
    %28 = arith.divf %27, %13 : vector<16x16xf32>
    %29 = arith.cmpf oeq, %2, %8 : vector<16x16xf32>
    %cst_6 = arith.constant 0.166666672 : f32
    %30 = vector.broadcast %cst_6 : f32 to vector<16x16xf32>
    %31 = arith.mulf %28, %30 : vector<16x16xf32>
    %32 = math.floor %31 : vector<16x16xf32>
    %cst_7 = arith.constant 6.000000e+00 : f32
    %33 = vector.broadcast %cst_7 : f32 to vector<16x16xf32>
    %34 = arith.mulf %33, %32 : vector<16x16xf32>
    %35 = arith.subf %28, %34 : vector<16x16xf32>
    %36 = arith.select %29, %35, %26 : vector<16x16xi1>, vector<16x16xf32>
    %37 = arith.cmpf oeq, %10, %8 : vector<16x16xf32>
    %cst_8 = arith.constant 0.000000e+00 : f32
    %38 = vector.broadcast %cst_8 : f32 to vector<16x16xf32>
    %39 = arith.select %37, %38, %36 : vector<16x16xi1>, vector<16x16xf32>
    %cst_9 = arith.constant 0.166666672 : f32
    %40 = vector.broadcast %cst_9 : f32 to vector<16x16xf32>
    %41 = arith.mulf %39, %40 : vector<16x16xf32>
    %42 = arith.subf %8, %10 : vector<16x16xf32>
    %cst_10 = arith.constant 9.99999993E-9 : f32
    %43 = vector.broadcast %cst_10 : f32 to vector<16x16xf32>
    %44 = arith.addf %8, %43 : vector<16x16xf32>
    %45 = arith.divf %42, %44 : vector<16x16xf32>
    %cst_11 = arith.constant 0.000000e+00 : f32
    %46 = vector.broadcast %cst_11 : f32 to vector<16x16xf32>
    %47 = arith.cmpf oeq, %8, %46 : vector<16x16xf32>
    %cst_12 = arith.constant 0.000000e+00 : f32
    %48 = vector.broadcast %cst_12 : f32 to vector<16x16xf32>
    %49 = arith.select %47, %48, %45 : vector<16x16xi1>, vector<16x16xf32>
    %cst_13 = arith.constant 2.550000e+02 : f32
    %50 = vector.broadcast %cst_13 : f32 to vector<16x16xf32>
    %51 = arith.mulf %41, %50 : vector<16x16xf32>
    %cst_14 = arith.constant 2.550000e+02 : f32
    %52 = vector.broadcast %cst_14 : f32 to vector<16x16xf32>
    %53 = arith.mulf %49, %52 : vector<16x16xf32>
    %cst_15 = arith.constant 2.550000e+02 : f32
    %54 = vector.broadcast %cst_15 : f32 to vector<16x16xf32>
    %55 = arith.mulf %8, %54 : vector<16x16xf32>
    %cst_16 = arith.constant 0.000000e+00 : f32
    %56 = vector.broadcast %cst_16 : f32 to vector<16x16xf32>
    %57 = arith.cmpf oge, %51, %56 : vector<16x16xf32>
    %cst_17 = arith.constant 1.100000e+02 : f32
    %58 = vector.broadcast %cst_17 : f32 to vector<16x16xf32>
    %59 = arith.cmpf oge, %53, %58 : vector<16x16xf32>
    %60 = arith.andi %57, %59 : vector<16x16xi1>
    %cst_18 = arith.constant 1.100000e+02 : f32
    %61 = vector.broadcast %cst_18 : f32 to vector<16x16xf32>
    %62 = arith.cmpf oge, %55, %61 : vector<16x16xf32>
    %63 = arith.andi %60, %62 : vector<16x16xi1>
    %cst_19 = arith.constant 1.400000e+01 : f32
    %64 = vector.broadcast %cst_19 : f32 to vector<16x16xf32>
    %65 = arith.cmpf olt, %51, %64 : vector<16x16xf32>
    %66 = arith.andi %63, %65 : vector<16x16xi1>
    %cst_20 = arith.constant 2.550000e+02 : f32
    %67 = vector.broadcast %cst_20 : f32 to vector<16x16xf32>
    %68 = arith.cmpf ole, %53, %67 : vector<16x16xf32>
    %69 = arith.andi %66, %68 : vector<16x16xi1>
    %cst_21 = arith.constant 2.550000e+02 : f32
    %70 = vector.broadcast %cst_21 : f32 to vector<16x16xf32>
    %71 = arith.cmpf ole, %55, %70 : vector<16x16xf32>
    %72 = arith.andi %69, %71 : vector<16x16xi1>
    %73 = arith.extui %72 : vector<16x16xi1> to vector<16x16xi32>
    %74 = arith.sitofp %73 : vector<16x16xi32> to vector<16x16xf32>
    %75 = tpu.iota {dimensions = array<i32: 0>} : vector<16x16xi32>
    %76 = tpu.iota {dimensions = array<i32: 1>} : vector<16x16xi32>
    %77 = arith.subi %75, %76 : vector<16x16xi32>
    %78 = math.absi %77 : vector<16x16xi32>
    %c0_i32 = arith.constant 0 : i32
    %79 = vector.broadcast %c0_i32 : i32 to vector<16x16xi32>
    %80 = arith.cmpi eq, %78, %79 : vector<16x16xi32>
    %c1_i32 = arith.constant 1 : i32
    %81 = vector.broadcast %c1_i32 : i32 to vector<16x16xi32>
    %82 = arith.cmpi eq, %78, %81 : vector<16x16xi32>
    %cst_22 = arith.constant 2.500000e-01 : f32
    %cst_23 = arith.constant 0.000000e+00 : f32
    %83 = vector.broadcast %cst_22 : f32 to vector<16x16xf32>
    %84 = vector.broadcast %cst_23 : f32 to vector<16x16xf32>
    %85 = arith.select %82, %83, %84 : vector<16x16xi1>, vector<16x16xf32>
    %cst_24 = arith.constant 5.000000e-01 : f32
    %86 = vector.broadcast %cst_24 : f32 to vector<16x16xf32>
    %87 = arith.select %80, %86, %85 : vector<16x16xi1>, vector<16x16xf32>
    %88 = tpu.iota {dimensions = array<i32: 0>} : vector<16x16xi32>
    %89 = tpu.iota {dimensions = array<i32: 1>} : vector<16x16xi32>
    %90 = arith.subi %88, %89 : vector<16x16xi32>
    %91 = math.absi %90 : vector<16x16xi32>
    %c0_i32_25 = arith.constant 0 : i32
    %92 = vector.broadcast %c0_i32_25 : i32 to vector<16x16xi32>
    %93 = arith.cmpi eq, %91, %92 : vector<16x16xi32>
    %c1_i32_26 = arith.constant 1 : i32
    %94 = vector.broadcast %c1_i32_26 : i32 to vector<16x16xi32>
    %95 = arith.cmpi eq, %91, %94 : vector<16x16xi32>
    %cst_27 = arith.constant 2.500000e-01 : f32
    %cst_28 = arith.constant 0.000000e+00 : f32
    %96 = vector.broadcast %cst_27 : f32 to vector<16x16xf32>
    %97 = vector.broadcast %cst_28 : f32 to vector<16x16xf32>
    %98 = arith.select %95, %96, %97 : vector<16x16xi1>, vector<16x16xf32>
    %cst_29 = arith.constant 5.000000e-01 : f32
    %99 = vector.broadcast %cst_29 : f32 to vector<16x16xf32>
    %100 = arith.select %93, %99, %98 : vector<16x16xi1>, vector<16x16xf32>
    %cst_30 = arith.constant dense<0.000000e+00> : vector<16x16xf32>
    %101 = tpu.matmul %87, %74, %cst_30 {dimension_numbers = #tpu.dot_dimension_numbers<[1], [0], [0], [1], [0, 0, 1, 1], [], []>} : vector<16x16xf32>, vector<16x16xf32>, vector<16x16xf32> -> vector<16x16xf32>
    %cst_31 = arith.constant dense<0.000000e+00> : vector<16x16xf32>
    %102 = tpu.matmul %101, %100, %cst_31 {dimension_numbers = #tpu.dot_dimension_numbers<[1], [0], [0], [1], [0, 0, 1, 1], [], []>} : vector<16x16xf32>, vector<16x16xf32>, vector<16x16xf32> -> vector<16x16xf32>
    %103 = vector.shape_cast %102 : vector<16x16xf32> to vector<1x1x16x16xf32>
    %c0_32 = arith.constant 0 : index
    %c0_33 = arith.constant 0 : index
    %c0_34 = arith.constant 0 : index
    %c0_35 = arith.constant 0 : index
    %104 = vector.load %arg2[%c0_32, %c0_33, %c0_34, %c0_35] : memref<1x1x16x16xf32, #tpu.memory_space<vmem>>, vector<1x1x16x16xf32>
    tpu.vector_store %arg2[%c0_32, %c0_33, %c0_34, %c0_35], %103 {strides = array<i32>} : memref<1x1x16x16xf32, #tpu.memory_space<vmem>>, vector<1x1x16x16xf32>,
    return
  }
  func.func @transform_0(%arg0: i32) -> (i32, i32, i32, i32) {
    %c0_i32 = arith.constant 0 : i32
    %c0_i32_0 = arith.constant 0 : i32
    %c0_i32_1 = arith.constant 0 : i32
    %c0_i32_2 = arith.constant 0 : i32
    return %arg0, %c0_i32, %c0_i32_0, %c0_i32_1 : i32, i32, i32, i32
  }
  func.func @transform_1(%arg0: i32) -> (i32, i32, i32, i32) {
    %c0_i32 = arith.constant 0 : i32
    %c0_i32_0 = arith.constant 0 : i32
    %c0_i32_1 = arith.constant 0 : i32
    %c0_i32_2 = arith.constant 0 : i32
    return %arg0, %c0_i32, %c0_i32_0, %c0_i32_1 : i32, i32, i32, i32
  }
}

</mosaic_0001>

<llo_original>
// kernel: tpu_custom_call.1
$region0: #{tpu_custom_call.1}
  #allocation0 [shape = 'u32[]', space=smem, size = 0x4, offset = 0x4, fixed_abs, tag = 'smem constant byte address 0x4 - core index']
  #allocation1 [shape = 'u32[144,128]{1,0:T(1,128)}', space=vmem, size = 0x12000, scoped, tag = 'internal scratch']
  %s0 = inlined_call_operand.hbm [shape: f32[2,3,16,16], index: 0, kind: input, shape index: {}]
  %s1 = inlined_call_operand.hbm [shape: f32[2,1,16,16], index: 1, kind: output, shape index: {}]
  %s2 = sld [smem:[#allocation0]]
  $region41: #{tpu_custom_call.1} parent=0
    _
  %s4 = ssub.s32 1, %s2
  %s5 = scalar_select 0, %s4, %s2
  $region1: #{tpu_custom_call.1} parent=0
    #allocation2 [shape = 'u8[49152]{0}', space=vmem, size = 0xc000, scoped, tag = 'input window, operand 0']
    #allocation3 [shape = 's32[2]{0}', space=sflag, size = 0x8, scoped, tag = 'scoped memory for tpu_custom_call.1']
    #allocation4 [shape = 's32[2]{0}', space=sflag, size = 0x8, scoped, tag = 'scoped memory for tpu_custom_call.1']
    #allocation5 [shape = 'u8[16384]{0}', space=vmem, size = 0x4000, scoped, tag = 'output window, operand 0']
    %6 = vsyncpa [#allocation3], 0
    %s7 = scalar_lea.sflag [#allocation3], 1
    %8 = vsyncpa %s7, 0
    %9 = vsyncpa [#allocation4], 0
    %s10 = scalar_lea.sflag [#allocation4], 1
    %11 = vsyncpa %s10, 0
    loop: start=0, step=1, limit=4
    $region2: #{tpu_custom_call.1} parent=1 // loop_pre_header
      _
    $region3: #{tpu_custom_call.1} parent=1 // loop_header
      %s13 = sphi 0, %s17
      %p14 = scmp.ge.s32.totalorder %s13, 4
      %s23 = sphi 0, %s25
      %s26 = sphi 0, %s23
      %s27 = sphi 0, %s26
      %s43 = sphi 0, %s27
      %s49 = sphi 0, %s51
      %s52 = sphi 0, %s49
      %s53 = sphi 0, %s52
      %s69 = sphi 0, %s53
    $region4: #{tpu_custom_call.1} parent=1 // loop_header_branch
      %16 = sbr.rel (%p14) target = $region8
    $region5: #{tpu_custom_call.1} parent=1 // loop_body
      %s18 = ssub.s32 %s13, 1
      %s19 = ssub.s32 %s13, 2
      %s20 = sadd.s32 %s13, 1
      %s21 = ssub.s32 %s13, %s20
      %p22 = scmp.eq.s32.totalorder %s21, 0
      %s24 = sadd.s32 %s23, 1
      %s25 = scalar_select %p22, %s23, %s24
      %p28 = pneg %p22
      %p29 = scmp.eq.s32.totalorder %s13, 1
      %p30 = por %p28, %p29
      %p31 = scmp.ne.s32.totalorder %s23, %s26
      %p32 = scmp.eq.s32.totalorder %s13, 0
      %p33 = por %p31, %p32
      %p34 = scmp.ne.s32.totalorder %s23, %s26
      %p35 = scmp.eq.s32.totalorder %s18, 1
      %p36 = por %p34, %p35
      %p37 = scmp.ne.s32.totalorder %s26, %s27
      %p38 = scmp.eq.s32.totalorder %s18, 0
      %p39 = por %p37, %p38
      %p40 = scmp.ne.s32.totalorder %s26, %s27
      %p41 = scmp.eq.s32.totalorder %s19, 1
      %p42 = por %p40, %p41
      %p44 = scmp.ne.s32.totalorder %s27, %s43
      %p45 = scmp.eq.s32.totalorder %s19, 0
      %p46 = por %p44, %p45
      %s47 = ssub.s32 %s13, %s20
      %p48 = scmp.eq.s32.totalorder %s47, 0
      %s50 = sadd.s32 %s49, 1
      %s51 = scalar_select %p48, %s49, %s50
      %p54 = pneg %p48
      %p55 = scmp.eq.s32.totalorder %s13, 1
      %p56 = por %p54, %p55
      %p57 = scmp.ne.s32.totalorder %s49, %s52
      %p58 = scmp.eq.s32.totalorder %s13, 0
      %p59 = por %p57, %p58
      %p60 = scmp.ne.s32.totalorder %s49, %s52
      %p61 = scmp.eq.s32.totalorder %s18, 1
      %p62 = por %p60, %p61
      %p63 = scmp.ne.s32.totalorder %s52, %s53
      %p64 = scmp.eq.s32.totalorder %s18, 0
      %p65 = por %p63, %p64
      %p66 = scmp.ne.s32.totalorder %s52, %s53
      %p67 = scmp.eq.s32.totalorder %s19, 1
      %p68 = por %p66, %p67
      %p70 = scmp.ne.s32.totalorder %s53, %s69
      %p71 = scmp.eq.s32.totalorder %s19, 0
      %p72 = por %p70, %p71
      %p73 = scmp.le.s32.totalorder 1, %s13
      %p74 = scmp.lt.s32.totalorder %s13, 3
      %p75 = pnand %p73, %p74
      %p76 = pneg %p75
      // Predicated region
      $region9: #{tpu_custom_call.1} parent=5 // pred_check
        _
      $region10: #{tpu_custom_call.1} parent=5 // pred_check_branch
        %78 = sbr.rel (%p75) target = $region12
      $region11: #{tpu_custom_call.1} parent=5 // pred_region
        %s79 = ssub.s32 %s13, 1
      $region12: #{tpu_custom_call.1} parent=5 // pred_fallthru
        _
      %p80 = scmp.lt.s32.totalorder %s13, 2
      // Predicated region
      $region13: #{tpu_custom_call.1} parent=5 // pred_check
        %p81 = pneg %p80
      $region14: #{tpu_custom_call.1} parent=5 // pred_check_branch
        %83 = sbr.rel (%p81) target = $region16
      $region15: #{tpu_custom_call.1} parent=5 // pred_region
        // Predicated region
        $region17: #{tpu_custom_call.1} parent=15 // pred_check
          %p84 = pneg %p33
        $region18: #{tpu_custom_call.1} parent=15 // pred_check_branch
          %86 = sbr.rel (%p84) target = $region20
        $region19: #{tpu_custom_call.1} parent=15 // pred_region
          %s87 = sand.u32 %s23, 1
          %s88 = scalar_lea.sflag [#allocation3], %s87
          %s89 = sand.u32 %s23, 1
          %s90 = smul.addr %s89, 48
          %s91 = scalar_lea.vmem [#allocation2], %s90
          %s93 = ssub.s32 768, 768
          %94 = vsyncadd %s88, %s93
          %s95 = smul.addr %s13, 6
          %s96 = smul.addr %s95, 128
          %s97 = scalar_lea.hbm %s0, %s96
          %s98 = sshll.u32 %s91, 4
          %s99 = int_to_ptr.vmem [resolvable:$true] %s98
          %104 = dma.hbm_to_vmem [thread:$0]  %s97, 768, %s99, %s88, 128, 128, 8
        $region20: #{tpu_custom_call.1} parent=15 // pred_fallthru
          _
      $region16: #{tpu_custom_call.1} parent=5 // pred_fallthru
        _
      %p105 = scmp.le.s32.totalorder 1, %s13
      %p106 = scmp.lt.s32.totalorder %s13, 3
      %p107 = pnand %p105, %p106
      %p108 = pneg %p107
      // Predicated region
      $region21: #{tpu_custom_call.1} parent=5 // pred_check
        _
      $region22: #{tpu_custom_call.1} parent=5 // pred_check_branch
        %110 = sbr.rel (%p107) target = $region24
      $region23: #{tpu_custom_call.1} parent=5 // pred_region
        %s111 = ssub.s32 %s13, 1
        %s112 = sand.u32 %s26, 1
        %s113 = scalar_lea.sflag [#allocation3], %s112
        %s114 = sand.u32 %s26, 1
        %s115 = smul.addr %s114, 48
        %s116 = scalar_lea.vmem [#allocation2], %s115
        // Predicated region
        $region25: #{tpu_custom_call.1} parent=23 // pred_check
          %p117 = pneg %p39
        $region26: #{tpu_custom_call.1} parent=23 // pred_check_branch
          %119 = sbr.rel (%p117) target = $region28
        $region27: #{tpu_custom_call.1} parent=23 // pred_region
          %120 = dma.done %s113, 768
        $region28: #{tpu_custom_call.1} parent=23 // pred_fallthru
          _
        %s121 = sand.u32 %s26, 1
        %s122 = scalar_lea.sflag [#allocation3], %s121
        %s123 = sand.u32 %s26, 1
        %s124 = smul.addr %s123, 48
        %s125 = scalar_lea.vmem [#allocation2], %s124
        %p126 = pneg %p39
        %p127 = pneg %p36
        %p128 = pneg %p65
        %p129 = pneg %p62
        %s130 = sand.u32 %s52, 1
        %s131 = scalar_lea.sflag [#allocation4], %s130
        %s132 = sand.u32 %s52, 1
        %s133 = smul.addr %s132, 16
        %s134 = scalar_lea.vmem [#allocation5], %s133
        %v135 = vld [vmem:[%s116] sm:$0xff]
        %v136 = vld [vmem:[%s116 + $0x8] sm:$0xff]
        %v137 = vld [vmem:[%s116 + $0x10] sm:$0xff]
        %v138 = vld [vmem:[%s116 + $0x18] sm:$0xff]
        %v139 = vld [vmem:[%s116 + $0x20] sm:$0xff]
        %v140 = vld [vmem:[%s116 + $0x28] sm:$0xff]
        %v141 = vmax.f32 %v135, %v137
        %v142 = vmax.f32 %v136, %v138
        %v143 = vmax.f32 %v141, %v139
        %v144 = vmax.f32 %v142, %v140
        %v145 = vmin.f32 %v135, %v137
        %v146 = vmin.f32 %v136, %v138
        %v147 = vmin.f32 %v145, %v139
        %v148 = vmin.f32 %v146, %v140
        %v149 = vsub.f32 %v143, %v147
        %v150 = vsub.f32 %v144, %v148
        %v151 = vadd.f32 %v149, 1e-08
        %v152 = vadd.f32 %v150, 1e-08
        %vm153 = vcmp.eq.f32.partialorder %v139, %v143
        %vm154 = vcmp.eq.f32.partialorder %v140, %v144
        %v155 = vsub.f32 %v135, %v137
        %v156 = vsub.f32 %v136, %v138
        %v157 = vrcp.pop %v151
        %v158 = vmul.f32 %v155, %v157
        %v159 = vrcp.pop %v152
        %v160 = vmul.f32 %v156, %v159
        %v161 = vadd.f32 %v158, 4.0
        %v162 = vadd.f32 %v160, 4.0
        %v163 = vsel %vm153, %v161, 0.0
        %v164 = vsel %vm154, %v162, 0.0
        %vm165 = vcmp.eq.f32.partialorder %v137, %v143
        %vm166 = vcmp.eq.f32.partialorder %v138, %v144
        %v167 = vsub.f32 %v139, %v135
        %v168 = vsub.f32 %v140, %v136
        %v169 = vmul.f32 %v167, %v157
        %v170 = vmul.f32 %v168, %v159
        %v171 = vadd.f32 %v169, 2.0
        %v172 = vadd.f32 %v170, 2.0
        %v173 = vsel %vm165, %v171, %v163
        %v174 = vsel %vm166, %v172, %v164
        %v175 = vsub.f32 %v137, %v139
        %v176 = vsub.f32 %v138, %v140
        %v177 = vmul.f32 %v175, %v157
        %v178 = vmul.f32 %v176, %v159
        %vm179 = vcmp.eq.f32.partialorder %v135, %v143
        %vm180 = vcmp.eq.f32.partialorder %v136, %v144
        %v181 = vmul.f32 %v177, 0.16666667
        %v182 = vmul.f32 %v178, 0.16666667
        %v183 = vfloor.f32 %v181
        %v184 = vfloor.f32 %v182
        %v185 = vmul.f32 %v183, 6.0
        %v186 = vmul.f32 %v184, 6.0
        %v187 = vsub.f32 %v177, %v185
        %v188 = vsub.f32 %v178, %v186
        %v189 = vsel %vm179, %v187, %v173
        %v190 = vsel %vm180, %v188, %v174
        %vm191 = vcmp.eq.f32.partialorder %v147, %v143
        %vm192 = vcmp.eq.f32.partialorder %v148, %v144
        %v193 = vsel %vm191, 0.0, %v189
        %v194 = vsel %vm192, 0.0, %v190
        %v195 = vmul.f32 %v193, 0.16666667
        %v196 = vmul.f32 %v194, 0.16666667
        %v197 = vadd.f32 %v143, 1e-08
        %v198 = vadd.f32 %v144, 1e-08
        %v199 = vrcp.pop %v197
        %v200 = vmul.f32 %v149, %v199
        %v201 = vrcp.pop %v198
        %v202 = vmul.f32 %v150, %v201
        %vm203 = vcmp.eq.f32.partialorder %v143, 0.0
        %vm204 = vcmp.eq.f32.partialorder %v144, 0.0
        %v205 = vsel %vm203, 0.0, %v200
        %v206 = vsel %vm204, 0.0, %v202
        %v207 = vmul.f32 %v195, 255.0
        %v208 = vmul.f32 %v196, 255.0
        %v209 = vmul.f32 %v205, 255.0
        %v210 = vmul.f32 %v206, 255.0
        %v211 = vmul.f32 %v143, 255.0
        %v212 = vmul.f32 %v144, 255.0
        %vm213 = vcmp.ge.f32.partialorder %v207, 0.0
        %vm214 = vcmp.ge.f32.partialorder %v208, 0.0
        %vm215 = vcmp.ge.f32.partialorder %v209, 110.0
        %vm216 = vcmp.ge.f32.partialorder %v210, 110.0
        %vm217 = vmand %vm213, %vm215
        %vm218 = vmand %vm214, %vm216
        %vm219 = vcmp.ge.f32.partialorder %v211, 110.0
        %vm220 = vcmp.ge.f32.partialorder %v212, 110.0
        %vm221 = vmand %vm217, %vm219
        %vm222 = vmand %vm218, %vm220
        %vm223 = vcmp.lt.f32.partialorder %v207, 14.0
        %vm224 = vcmp.lt.f32.partialorder %v208, 14.0
        %vm225 = vmand %vm221, %vm223
        %vm226 = vmand %vm222, %vm224
        %vm227 = vcmp.le.f32.partialorder %v209, 255.0
        %vm228 = vcmp.le.f32.partialorder %v210, 255.0
        %vm229 = vmand %vm225, %vm227
        %vm230 = vmand %vm226, %vm228
        %vm231 = vcmp.le.f32.partialorder %v211, 255.0
        %vm232 = vcmp.le.f32.partialorder %v212, 255.0
        %vm233 = vmand %vm229, %vm231
        %vm234 = vmand %vm230, %vm232
        %v235 = vsel %vm233, 1, 0
        %v236 = vsel %vm234, 1, 0
        %v237 = vcvt.s32.f32 %v235
        %v238 = vcvt.s32.f32 %v236
        %v239 = vlaneseq
        %v240 = vshrl.u32 %v239, 7
        %v241 = vadd.s32 %v240, 8
        %v242 = vlaneseq
        %v243 = vand.u32 %v242, 127
        %v244 = vsub.s32 %v240, %v243
        %v245 = vsub.s32 %v241, %v243
        %vm246 = vcmp.lt.s32.totalorder %v244, 0
        %v247 = vsub.s32 0, %v244
        %v248 = vsel %vm246, %v247, %v244
        %vm249 = vcmp.lt.s32.totalorder %v245, 0
        %v250 = vsub.s32 0, %v245
        %v251 = vsel %vm249, %v250, %v245
        %vm252 = vcmp.eq.s32.totalorder %v248, 0
        %vm253 = vcmp.eq.s32.totalorder %v251, 0
        %vm254 = vcmp.eq.s32.totalorder %v248, 1
        %vm255 = vcmp.eq.s32.totalorder %v251, 1
        %v256 = vsel %vm254, 0.25, 0.0
        %v257 = vsel %vm255, 0.25, 0.0
        %v258 = vsel %vm252, 0.5, %v256
        %v259 = vsel %vm253, 0.5, %v257
        %vm260 = vcmask 130048
        %v262 = vsel %vm260, %v258, 0
        %v265 = vsel %vm260, %v259, 0
        %267 = vmatprep.subr.mxu0 0.0
        %268 = vmatpush1.msra.mxu0 %v237
        %269 = vmatprep.subr.mxu0 0.0
        %270 = vmatpush1.msra.mxu0 %v238
        %271 = vmatprep.subr.mxu0 0.0
        %272 = vmatpush1.msra.mxu0 0.0
        %273 = vmatprep.subr.mxu0 0.0
        %274 = vmatpush1.msra.mxu0 0.0
        %275 = vmatprep.subr.mxu0 0.0
        %276 = vmatpush1.msra.mxu0 0.0
        %277 = vmatprep.subr.mxu0 0.0
        %278 = vmatpush1.msra.mxu0 0.0
        %279 = vmatprep.subr.mxu0 0.0
        %280 = vmatpush1.msra.mxu0 0.0
        %281 = vmatprep.subr.mxu0 0.0
        %282 = vmatpush1.msra.mxu0 0.0
        %283 = vmatprep.subr.mxu0 0.0
        %284 = vmatpush1.msra.mxu0 0.0
        %285 = vmatprep.subr.mxu0 0.0
        %286 = vmatpush1.msra.mxu0 0.0
        %287 = vmatprep.subr.mxu0 0.0
        %288 = vmatpush1.msra.mxu0 0.0
        %289 = vmatprep.subr.mxu0 0.0
        %290 = vmatpush1.msra.mxu0 0.0
        %291 = vmatprep.subr.mxu0 0.0
        %292 = vmatpush1.msra.mxu0 0.0
        %293 = vmatprep.subr.mxu0 0.0
        %294 = vmatpush1.msra.mxu0 0.0
        %295 = vmatprep.subr.mxu0 0.0
        %296 = vmatpush1.msra.mxu0 0.0
        %297 = vmatprep.subr.mxu0 0.0
        %298 = vmatpush1.msra.mxu0 0.0
        %299 = vmatprep.subr.mxu0 0.0
        %300 = vmatpush1.msra.mxu0 0.0
        %301 = vmatprep.subr.mxu0 0.0
        %302 = vmatpush1.msra.mxu0 0.0
        %303 = vmatprep.subr.mxu0 0.0
        %304 = vmatpush1.msra.mxu0 0.0
        %305 = vmatprep.subr.mxu0 0.0
        %306 = vmatpush1.msra.mxu0 0.0
        %307 = vmatprep.subr.mxu0 0.0
        %308 = vmatpush1.msra.mxu0 0.0
        %309 = vmatprep.subr.mxu0 0.0
        %310 = vmatpush1.msra.mxu0 0.0
        %311 = vmatprep.subr.mxu0 0.0
        %312 = vmatpush1.msra.mxu0 0.0
        %313 = vmatprep.subr.mxu0 0.0
        %314 = vmatpush1.msra.mxu0 0.0
        %315 = vmatprep.subr.mxu0 0.0
        %316 = vmatpush1.msra.mxu0 0.0
        %317 = vmatprep.subr.mxu0 0.0
        %318 = vmatpush1.msra.mxu0 0.0
        %319 = vmatprep.subr.mxu0 0.0
        %320 = vmatpush1.msra.mxu0 0.0
        %321 = vmatprep.subr.mxu0 0.0
        %322 = vmatpush1.msra.mxu0 0.0
        %323 = vmatprep.subr.mxu0 0.0
        %324 = vmatpush1.msra.mxu0 0.0
        %325 = vmatprep.subr.mxu0 0.0
        %326 = vmatpush1.msra.mxu0 0.0
        %327 = vmatprep.subr.mxu0 0.0
        %328 = vmatpush1.msra.mxu0 0.0
        %329 = vmatprep.subr.mxu0 0.0
        %330 = vmatpush1.msra.mxu0 0.0
        %331 = vmatprep.mubr.f32.mxu0 0.0
        %332 = vmatmul.mubr.f32.gmra.mrb[0].mxu0 %v262
        %v333 = vpop.f32.mrb[0].mxu0
        %v334 = vadd.f32 0.0, %v333
        %v335 = vpop.f32.mrb[0].mxu0
        %336 = vmatprep.mubr.f32.mxu0 0.0
        %337 = vmatmul.mubr.f32.gmra.mrb[0].mxu0 %v265
        %v338 = vpop.f32.mrb[0].mxu0
        %v339 = vadd.f32 0.0, %v338
        %v340 = vpop.f32.mrb[0].mxu0
        %341 = vdwg.mxu0
        %v343 = vsel %vm260, %v334, 0
        %v346 = vsel %vm260, %v339, 0
        %348 = vmatprep.subr.mxu0 0.0
        %349 = vmatpush1.msra.mxu0 %v258
        %350 = vmatprep.subr.mxu0 0.0
        %351 = vmatpush1.msra.mxu0 %v259
        %352 = vmatprep.subr.mxu0 0.0
        %353 = vmatpush1.msra.mxu0 0.0
        %354 = vmatprep.subr.mxu0 0.0
        %355 = vmatpush1.msra.mxu0 0.0
        %356 = vmatprep.subr.mxu0 0.0
        %357 = vmatpush1.msra.mxu0 0.0
        %358 = vmatprep.subr.mxu0 0.0
        %359 = vmatpush1.msra.mxu0 0.0
        %360 = vmatprep.subr.mxu0 0.0
        %361 = vmatpush1.msra.mxu0 0.0
        %362 = vmatprep.subr.mxu0 0.0
        %363 = vmatpush1.msra.mxu0 0.0
        %364 = vmatprep.subr.mxu0 0.0
        %365 = vmatpush1.msra.mxu0 0.0
        %366 = vmatprep.subr.mxu0 0.0
        %367 = vmatpush1.msra.mxu0 0.0
        %368 = vmatprep.subr.mxu0 0.0
        %369 = vmatpush1.msra.mxu0 0.0
        %370 = vmatprep.subr.mxu0 0.0
        %371 = vmatpush1.msra.mxu0 0.0
        %372 = vmatprep.subr.mxu0 0.0
        %373 = vmatpush1.msra.mxu0 0.0
        %374 = vmatprep.subr.mxu0 0.0
        %375 = vmatpush1.msra.mxu0 0.0
        %376 = vmatprep.subr.mxu0 0.0
        %377 = vmatpush1.msra.mxu0 0.0
        %378 = vmatprep.subr.mxu0 0.0
        %379 = vmatpush1.msra.mxu0 0.0
        %380 = vmatprep.subr.mxu0 0.0
        %381 = vmatpush1.msra.mxu0 0.0
        %382 = vmatprep.subr.mxu0 0.0
        %383 = vmatpush1.msra.mxu0 0.0
        %384 = vmatprep.subr.mxu0 0.0
        %385 = vmatpush1.msra.mxu0 0.0
        %386 = vmatprep.subr.mxu0 0.0
        %387 = vmatpush1.msra.mxu0 0.0
        %388 = vmatprep.subr.mxu0 0.0
        %389 = vmatpush1.msra.mxu0 0.0
        %390 = vmatprep.subr.mxu0 0.0
        %391 = vmatpush1.msra.mxu0 0.0
        %392 = vmatprep.subr.mxu0 0.0
        %393 = vmatpush1.msra.mxu0 0.0
        %394 = vmatprep.subr.mxu0 0.0
        %395 = vmatpush1.msra.mxu0 0.0
        %396 = vmatprep.subr.mxu0 0.0
        %397 = vmatpush1.msra.mxu0 0.0
        %398 = vmatprep.subr.mxu0 0.0
        %399 = vmatpush1.msra.mxu0 0.0
        %400 = vmatprep.subr.mxu0 0.0
        %401 = vmatpush1.msra.mxu0 0.0
        %402 = vmatprep.subr.mxu0 0.0
        %403 = vmatpush1.msra.mxu0 0.0
        %404 = vmatprep.subr.mxu0 0.0
        %405 = vmatpush1.msra.mxu0 0.0
        %406 = vmatprep.subr.mxu0 0.0
        %407 = vmatpush1.msra.mxu0 0.0
        %408 = vmatprep.subr.mxu0 0.0
        %409 = vmatpush1.msra.mxu0 0.0
        %410 = vmatprep.subr.mxu0 0.0
        %411 = vmatpush1.msra.mxu0 0.0
        %412 = vmatprep.mubr.f32.mxu0 0.0
        %413 = vmatmul.mubr.f32.gmra.mrb[0].mxu0 %v343
        %v414 = vpop.f32.mrb[0].mxu0
        %v415 = vadd.f32 0.0, %v414
        %v416 = vpop.f32.mrb[0].mxu0
        %417 = vmatprep.mubr.f32.mxu0 0.0
        %418 = vmatmul.mubr.f32.gmra.mrb[0].mxu0 %v346
        %v419 = vpop.f32.mrb[0].mxu0
        %v420 = vadd.f32 0.0, %v419
        %v421 = vpop.f32.mrb[0].mxu0
        %422 = vdwg.mxu0
        %423 = vst.msk [vmem:[%s134] sm:$0xff] %vm260, %v415
        %424 = vst.msk [vmem:[%s134 + $0x8] sm:$0xff] %vm260, %v420
        %s425 = sand.u32 %s52, 1
        %s426 = scalar_lea.sflag [#allocation4], %s425
        %s427 = sand.u32 %s52, 1
        %s428 = smul.addr %s427, 16
        %s429 = scalar_lea.vmem [#allocation5], %s428
        // Predicated region
        $region29: #{tpu_custom_call.1} parent=23 // pred_check
          %p430 = pneg %p62
        $region30: #{tpu_custom_call.1} parent=23 // pred_check_branch
          %432 = sbr.rel (%p430) target = $region32
        $region31: #{tpu_custom_call.1} parent=23 // pred_region
          %s434 = ssub.s32 256, 256
          %435 = vsyncadd %s426, %s434
          %s436 = smul.addr %s18, 2
          %s437 = smul.addr %s436, 128
          %s438 = scalar_lea.hbm %s1, %s437
          %s439 = sshll.u32 %s429, 4
          %s440 = int_to_ptr.vmem [resolvable:$true] %s439
          %445 = dma.vmem_to_hbm [thread:$0]  %s440, 256, %s438, %s426, 128, 128, 8
        $region32: #{tpu_custom_call.1} parent=23 // pred_fallthru
          _
      $region24: #{tpu_custom_call.1} parent=5 // pred_fallthru
        _
      %p446 = scmp.le.s32.totalorder 2, %s13
      // Predicated region
      $region33: #{tpu_custom_call.1} parent=5 // pred_check
        %p447 = pneg %p446
      $region34: #{tpu_custom_call.1} parent=5 // pred_check_branch
        %449 = sbr.rel (%p447) target = $region36
      $region35: #{tpu_custom_call.1} parent=5 // pred_region
        %s450 = ssub.s32 %s13, 2
        // Predicated region
        $region37: #{tpu_custom_call.1} parent=35 // pred_check
          %p451 = pneg %p68
        $region38: #{tpu_custom_call.1} parent=35 // pred_check_branch
          %453 = sbr.rel (%p451) target = $region40
        $region39: #{tpu_custom_call.1} parent=35 // pred_region
          %s454 = sand.u32 %s53, 1
          %s455 = scalar_lea.sflag [#allocation4], %s454
          %s456 = sand.u32 %s53, 1
          %s457 = smul.addr %s456, 16
          %s458 = scalar_lea.vmem [#allocation5], %s457
          %459 = dma.done %s455, 256
        $region40: #{tpu_custom_call.1} parent=35 // pred_fallthru
          _
      $region36: #{tpu_custom_call.1} parent=5 // pred_fallthru
        _
    $region6: #{tpu_custom_call.1} parent=1 // loop_footer
      %s17 = sadd.s32 1, %s13
    $region7: #{tpu_custom_call.1} parent=1 // loop_footer_branch
      %12 = sbr.rel target = $region3
    $region8: #{tpu_custom_call.1} parent=1 // loop_exit
      _
    %460 = vsyncpa [#allocation3], 1
    %s461 = scalar_lea.sflag [#allocation3], 1
    %462 = vsyncpa %s461, 1
    %463 = vsyncpa [#allocation4], 1
    %s464 = scalar_lea.sflag [#allocation4], 1
    %465 = vsyncpa %s464, 1

</llo_original>
